<compile_context>
chip_gen: v5e
topology: v5e:2x2
jax: 0.10.0
libtpu: 0.0.40
codegen_flags: <defaults>
</compile_context>

<pallas_src>
import functools

import jax
import jax.numpy as jnp
from jax import lax
from jax.experimental import pallas as pl
from jax.experimental.pallas import tpu as pltpu

ALPHA = 1.0
GAMMA = 2.0
REDUCTION = "mean"  # matches the PyTorch default
_LANES = 128
_SUBLANES = 8


def _round_up(x, m):
    return ((x + m - 1) // m) * m


def _focal_loss_kernel(logits_ref, target_ref, out_ref, *,
                       n_total, alpha, gamma, bf16_exp):
    """One grid step: focal-loss partial sum over a (TN, C) row tile."""
    i = pl.program_id(0)
    # .astype is a no-op for f32 inputs; keeps bf16 logits working with all
    # math in f32.
    x = logits_ref[...].astype(jnp.float32)        # (TN, C)
    t = target_ref[...]                            # (TN, 1) int32
    tn, c = x.shape

    # Numerically-stable log-sum-exp over the class (lane) axis.
    m = jnp.max(x, axis=-1, keepdims=True)                              # (TN, 1)
    xm = x - m
    if bf16_exp:
        # x - m <= 0 so exp is in (0, 1]; bf16 error ~2^-8 is negligible in
        # the LSE.  Halves EUP pushes (v6e/v7x only; v5e has no bf16 EUP).
        p = jnp.exp(xm.astype(jnp.bfloat16)).astype(jnp.float32)
    else:
        p = jnp.exp(xm)
    lse = jnp.log(jnp.sum(p, axis=-1, keepdims=True)) + m               # (TN, 1)

    # Gather the target-class logit with a one-hot compare + masked sum
    # (rides VPU/XLU slots; deliberately NOT a one-hot matmul on the MXU).
    # NOTE: out-of-range targets silently give tgt_logit = 0 (inputs trusted).
    col = lax.broadcasted_iota(jnp.int32, (tn, c), 1)
    tgt_logit = jnp.sum(jnp.where(col == t, x, 0.0), axis=-1, keepdims=True)

    ce = lse - tgt_logit                           # per-row cross entropy
    pt = jnp.exp(-ce)
    if float(gamma) == 2.0:
        one_m_pt = 1.0 - pt
        focal = one_m_pt * one_m_pt                # VPU square, not EUP pow
    elif float(gamma) == 1.0:
        focal = jnp.maximum(1.0 - pt, 0.0)
    else:
        # Clamp: ce can round to a tiny negative => pt > 1 => pow(neg) NaN.
        focal = jnp.maximum(1.0 - pt, 0.0) ** gamma
    loss = focal * ce                              # (TN, 1)
    if float(alpha) != 1.0:
        loss = alpha * loss

    # Mask rows past the true batch size (last tile may be padded/garbage).
    # Mask AFTER all per-row math so NaN/Inf garbage is dropped, not spread.
    row = i * tn + lax.broadcasted_iota(jnp.int32, (tn, 1), 0)
    loss = jnp.where(row < n_total, loss, 0.0)

    # Lane-dense partial-sum output: broadcast the scalar across 128 lanes so
    # the store is an unmasked full-vreg vst.
    out_ref[...] = jnp.full((1, _LANES), jnp.sum(loss), dtype=jnp.float32)


def focal_loss(logits, target, *, alpha=ALPHA, gamma=GAMMA,
               reduction=REDUCTION, block_rows=None, bf16_exp=False):
    """logits: float [N, C] (f32 or bf16); target: int [N]. Returns scalar f32."""
    n, c = logits.shape
    target_2d = target.astype(jnp.int32).reshape(n, 1)
    itemsize = jnp.dtype(logits.dtype).itemsize

    # Per-generation VMEM budget (v7x has 64 MiB physical vs 128 MiB on
    # v5e/v6e); fall back conservatively to the smallest (v7x) if the query
    # is unavailable.
    try:
        vmem_cap = int(pltpu.get_tpu_info().vmem_capacity_bytes)
    except Exception:  # pragma: no cover - conservative fallback
        vmem_cap = 64 << 20
    per_buf_budget = max(2 << 20, min(8 << 20, vmem_cap // 10))

    if block_rows is None:
        # Bytes per row, per pipeline buffer: logits row + the (TN,1) int32
        # target row, which is padded to 128 lanes (512 B/row) in VMEM.
        bytes_per_row = c * itemsize + _LANES * 4
        block_rows = per_buf_budget // max(bytes_per_row, 1)

    if n <= _SUBLANES:
        block_rows = n                               # single full (tiny) block
    else:
        block_rows = max(_SUBLANES, (int(block_rows) // _SUBLANES) * _SUBLANES)
        # Keep grid >= 2 so both v7x TensorCores get work on the "parallel"
        # axis (measured no-op on single-TC v5e/v6e).
        block_rows = min(block_rows, _round_up(pl.cdiv(n, 2), _SUBLANES))

    grid = pl.cdiv(n, block_rows)

    # Explicit VMEM limit: double-buffered inputs + tiny output blocks plus
    # headroom for Mosaic's f32 tile-sized intermediates.  Capped at 3/4 of
    # physical VMEM (~48 MiB on v7x, ~96 MiB on v5e/v6e).
    f32_tile = block_rows * c * 4
    resident = 2 * (block_rows * c * itemsize + block_rows * _LANES * 4)
    resident += 2 * _LANES * 4
    vmem_limit = resident + 3 * f32_tile + (4 << 20)
    vmem_limit = int(min(max(vmem_limit, 16 << 20), vmem_cap * 3 // 4))

    cost = pl.CostEstimate(
        flops=int(n * (4 * c + 12)),
        transcendentals=int(n * (c + 2)),
        bytes_accessed=int(n * c * itemsize + n * 4 + grid * _LANES * 4),
    )

    kernel = functools.partial(
        _focal_loss_kernel, n_total=n, alpha=float(alpha), gamma=float(gamma),
        bf16_exp=bool(bf16_exp))

    partials = pl.pallas_call(
        kernel,
        grid=(grid,),
        out_shape=jax.ShapeDtypeStruct((1, grid * _LANES), jnp.float32),
        in_specs=[
            pl.BlockSpec((block_rows, c), lambda i: (i, 0)),
            pl.BlockSpec((block_rows, 1), lambda i: (i, 0)),
        ],
        out_specs=pl.BlockSpec((1, _LANES), lambda i: (0, i)),
        compiler_params=pltpu.CompilerParams(
            dimension_semantics=("parallel",),
            vmem_limit_bytes=vmem_limit),
        cost_estimate=cost,
    )(logits, target_2d)

    # Each block broadcast its partial across its 128-lane slot; take lane 0.
    total = jnp.sum(partials.reshape(grid, _LANES)[:, 0])
    return total / n if reduction == "mean" else total


def focal_loss_ref(logits, target, *, alpha=ALPHA, gamma=GAMMA,
                   reduction=REDUCTION):
    # pure-JAX reference for sanity checking
    logp = jax.nn.log_softmax(logits.astype(jnp.float32), axis=-1)
    ce = -jnp.take_along_axis(logp, target[:, None], axis=-1)[:, 0]
    pt = jnp.exp(-ce)
    loss = alpha * (1.0 - pt) ** gamma * ce
    return loss.mean() if reduction == "mean" else loss.sum()


if __name__ == "__main__":
    key = jax.random.PRNGKey(0)
    k1, k2 = jax.random.split(key)
    N, C = 70, 32   # ragged batch: last tile exercises the in-kernel mask
    logits = jax.random.normal(k1, (N, C), dtype=jnp.float32)
    target = jax.random.randint(k2, (N,), 0, C, dtype=jnp.int32)

    ref = focal_loss_ref(logits, target)

    out_auto = focal_loss(logits, target)            # auto-tiled, grid >= 2
    jax.block_until_ready(out_auto)
    assert jnp.allclose(out_auto, ref, atol=1e-5, rtol=1e-5), (out_auto, ref)

    out_small = focal_loss(logits, target, block_rows=16)  # 5 grid steps
    jax.block_until_ready(out_small)
    assert jnp.allclose(out_small, ref, atol=1e-5, rtol=1e-5), (out_small, ref)

    print("KERNEL_OK")
</pallas_src>

<mosaic_0001>
module attributes {stable_mosaic.version = 11 : i64} {
  func.func @_focal_loss_kernel(%arg0: i32, %arg1: memref<40x32xf32, #tpu.memory_space<vmem>>, %arg2: memref<40x1xi32, #tpu.memory_space<vmem>>, %arg3: memref<1x128xf32, #tpu.memory_space<vmem>>) attributes {dimension_semantics = [#tpu.dimension_semantics<parallel>], iteration_bounds = array<i64: 2>, scalar_prefetch = 0 : i64, scratch_operands = 0 : i64, tpu.core_type = #tpu.core_type<tc>, window_params = [{transform_indices = @transform_0, window_bounds = array<i64: 40, 32>}, {transform_indices = @transform_1, window_bounds = array<i64: 40, 1>}, {transform_indices = @transform_2, window_bounds = array<i64: 1, 128>}]} {
    %c0 = arith.constant 0 : index
    %c0_0 = arith.constant 0 : index
    %0 = vector.load %arg1[%c0, %c0_0] : memref<40x32xf32, #tpu.memory_space<vmem>>, vector<40x32xf32>
    %c0_1 = arith.constant 0 : index
    %c0_2 = arith.constant 0 : index
    %1 = vector.load %arg2[%c0_1, %c0_2] : memref<40x1xi32, #tpu.memory_space<vmem>>, vector<40x1xi32>
    %cst = arith.constant dense<0xFF800000> : vector<40xf32>
    %2 = vector.multi_reduction <maximumf>, %0, %cst [1] : vector<40x32xf32> to vector<40xf32>
    %3 = vector.shape_cast %2 : vector<40xf32> to vector<40x1xf32>
    %4 = vector.broadcast %3 : vector<40x1xf32> to vector<40x32xf32>
    %5 = arith.subf %0, %4 : vector<40x32xf32>
    %6 = math.exp %5 : vector<40x32xf32>
    %cst_3 = arith.constant dense<0.000000e+00> : vector<40xf32>
    %7 = vector.multi_reduction <add>, %6, %cst_3 [1] : vector<40x32xf32> to vector<40xf32>
    %8 = vector.shape_cast %7 : vector<40xf32> to vector<40x1xf32>
    %9 = math.log %8 : vector<40x1xf32>
    %10 = arith.addf %9, %3 : vector<40x1xf32>
    %11 = tpu.iota {dimensions = array<i32: 1>} : vector<40x32xi32>
    %12 = vector.broadcast %1 : vector<40x1xi32> to vector<40x32xi32>
    %13 = arith.cmpi eq, %11, %12 : vector<40x32xi32>
    %cst_4 = arith.constant 0.000000e+00 : f32
    %14 = vector.broadcast %cst_4 : f32 to vector<40x32xf32>
    %15 = arith.select %13, %0, %14 : vector<40x32xi1>, vector<40x32xf32>
    %cst_5 = arith.constant dense<0.000000e+00> : vector<40xf32>
    %16 = vector.multi_reduction <add>, %15, %cst_5 [1] : vector<40x32xf32> to vector<40xf32>
    %17 = vector.shape_cast %16 : vector<40xf32> to vector<40x1xf32>
    %18 = arith.subf %10, %17 : vector<40x1xf32>
    %cst_6 = arith.constant 0.000000e+00 : f32
    %19 = vector.broadcast %cst_6 : f32 to vector<40x1xf32>
    %20 = arith.subf %19, %18 : vector<40x1xf32>
    %21 = math.exp %20 : vector<40x1xf32>
    %cst_7 = arith.constant 1.000000e+00 : f32
    %22 = vector.broadcast %cst_7 : f32 to vector<40x1xf32>
    %23 = arith.subf %22, %21 : vector<40x1xf32>
    %24 = arith.mulf %23, %23 : vector<40x1xf32>
    %25 = arith.mulf %24, %18 : vector<40x1xf32>
    %c40_i32 = arith.constant 40 : i32
    %26 = arith.muli %arg0, %c40_i32 : i32
    %27 = tpu.iota {dimensions = array<i32: 0>} : vector<40x1xi32>
    %28 = vector.broadcast %26 : i32 to vector<40x1xi32>
    %29 = arith.addi %28, %27 : vector<40x1xi32>
    %c70_i32 = arith.constant 70 : i32
    %30 = vector.broadcast %c70_i32 : i32 to vector<40x1xi32>
    %31 = arith.cmpi slt, %29, %30 : vector<40x1xi32>
    %cst_8 = arith.constant 0.000000e+00 : f32
    %32 = vector.broadcast %cst_8 : f32 to vector<40x1xf32>
    %33 = arith.select %31, %25, %32 : vector<40x1xi1>, vector<40x1xf32>
    %34 = vector.shape_cast %33 : vector<40x1xf32> to vector<1x40x1xf32>
    %cst_9 = arith.constant dense<0.000000e+00> : vector<1xf32>
    %35 = vector.multi_reduction <add>, %34, %cst_9 [1, 2] : vector<1x40x1xf32> to vector<1xf32>
    %36 = vector.shape_cast %35 : vector<1xf32> to vector<1x1x1xf32>
    %37 = vector.extract %36[0, 0, 0] : f32 from vector<1x1x1xf32>
    %38 = vector.broadcast %37 : f32 to vector<1x128xf32>
    %c0_10 = arith.constant 0 : index
    %c0_11 = arith.constant 0 : index
    %39 = vector.load %arg3[%c0_10, %c0_11] : memref<1x128xf32, #tpu.memory_space<vmem>>, vector<1x128xf32>
    tpu.vector_store %arg3[%c0_10, %c0_11], %38 {strides = array<i32>} : memref<1x128xf32, #tpu.memory_space<vmem>>, vector<1x128xf32>,
    return
  }
  func.func @transform_0(%arg0: i32) -> (i32, i32) {
    %c0_i32 = arith.constant 0 : i32
    %c0_i32_0 = arith.constant 0 : i32
    return %arg0, %c0_i32 : i32, i32
  }
  func.func @transform_1(%arg0: i32) -> (i32, i32) {
    %c0_i32 = arith.constant 0 : i32
    %c0_i32_0 = arith.constant 0 : i32
    return %arg0, %c0_i32 : i32, i32
  }
  func.func @transform_2(%arg0: i32) -> (i32, i32) {
    %c0_i32 = arith.constant 0 : i32
    %c0_i32_0 = arith.constant 0 : i32
    return %c0_i32, %arg0 : i32, i32
  }
}

</mosaic_0001>

<llo_original>
// kernel: tpu_custom_call.1
$region0: #{tpu_custom_call.1}
  #allocation0 [shape = 'u32[]', space=smem, size = 0x4, offset = 0x4, fixed_abs, tag = 'smem constant byte address 0x4 - core index']
  #allocation1 [shape = 'u32[72,128]{1,0:T(1,128)}', space=vmem, size = 0x9000, scoped, tag = 'internal scratch']
  %s0 = inlined_call_operand.vmem [shape: f32[70,32], index: 0, kind: input, shape index: {}]
  %s1 = inlined_call_operand.vmem [shape: s32[70,1], index: 1, kind: input, shape index: {}]
  %s2 = inlined_call_operand.hbm [shape: f32[1,256], index: 2, kind: output, shape index: {}]
  %s3 = sld [smem:[#allocation0]]
  $region41: #{tpu_custom_call.1} parent=0
    _
  %s5 = ssub.s32 1, %s3
  %s6 = scalar_select 0, %s5, %s3
  $region1: #{tpu_custom_call.1} parent=0
    #allocation2 [shape = 'u8[1024]{0}', space=vmem, size = 0x400, scoped, tag = 'output window, operand 0']
    #allocation3 [shape = 's32[2]{0}', space=sflag, size = 0x8, scoped, tag = 'scoped memory for tpu_custom_call.1']
    %7 = vsyncpa [#allocation3], 0
    %s8 = scalar_lea.sflag [#allocation3], 1
    %9 = vsyncpa %s8, 0
    loop: start=0, step=1, limit=4
    $region2: #{tpu_custom_call.1} parent=1 // loop_pre_header
      _
    $region3: #{tpu_custom_call.1} parent=1 // loop_header
      %s11 = sphi 0, %s15
      %p12 = scmp.ge.s32.totalorder %s11, 4
      %s21 = sphi 0, %s23
      %s24 = sphi 0, %s21
      %s25 = sphi 0, %s24
      %s41 = sphi 0, %s25
      %s47 = sphi 0, %s49
      %s50 = sphi 0, %s47
      %s51 = sphi 0, %s50
      %s67 = sphi 0, %s51
      %s73 = sphi 0, %s75
      %s76 = sphi 0, %s73
      %s77 = sphi 0, %s76
      %s93 = sphi 0, %s77
    $region4: #{tpu_custom_call.1} parent=1 // loop_header_branch
      %14 = sbr.rel (%p12) target = $region8
    $region5: #{tpu_custom_call.1} parent=1 // loop_body
      %s16 = ssub.s32 %s11, 1
      %s17 = ssub.s32 %s11, 2
      %s18 = sadd.s32 %s11, 1
      %s19 = ssub.s32 %s11, %s18
      %p20 = scmp.eq.s32.totalorder %s19, 0
      %s22 = sadd.s32 %s21, 1
      %s23 = scalar_select %p20, %s21, %s22
      %p26 = pneg %p20
      %p27 = scmp.eq.s32.totalorder %s11, 1
      %p28 = por %p26, %p27
      %p29 = scmp.ne.s32.totalorder %s21, %s24
      %p30 = scmp.eq.s32.totalorder %s11, 0
      %p31 = por %p29, %p30
      %p32 = scmp.ne.s32.totalorder %s21, %s24
      %p33 = scmp.eq.s32.totalorder %s16, 1
      %p34 = por %p32, %p33
      %p35 = scmp.ne.s32.totalorder %s24, %s25
      %p36 = scmp.eq.s32.totalorder %s16, 0
      %p37 = por %p35, %p36
      %p38 = scmp.ne.s32.totalorder %s24, %s25
      %p39 = scmp.eq.s32.totalorder %s17, 1
      %p40 = por %p38, %p39
      %p42 = scmp.ne.s32.totalorder %s25, %s41
      %p43 = scmp.eq.s32.totalorder %s17, 0
      %p44 = por %p42, %p43
      %s45 = ssub.s32 %s11, %s18
      %p46 = scmp.eq.s32.totalorder %s45, 0
      %s48 = sadd.s32 %s47, 1
      %s49 = scalar_select %p46, %s47, %s48
      %p52 = pneg %p46
      %p53 = scmp.eq.s32.totalorder %s11, 1
      %p54 = por %p52, %p53
      %p55 = scmp.ne.s32.totalorder %s47, %s50
      %p56 = scmp.eq.s32.totalorder %s11, 0
      %p57 = por %p55, %p56
      %p58 = scmp.ne.s32.totalorder %s47, %s50
      %p59 = scmp.eq.s32.totalorder %s16, 1
      %p60 = por %p58, %p59
      %p61 = scmp.ne.s32.totalorder %s50, %s51
      %p62 = scmp.eq.s32.totalorder %s16, 0
      %p63 = por %p61, %p62
      %p64 = scmp.ne.s32.totalorder %s50, %s51
      %p65 = scmp.eq.s32.totalorder %s17, 1
      %p66 = por %p64, %p65
      %p68 = scmp.ne.s32.totalorder %s51, %s67
      %p69 = scmp.eq.s32.totalorder %s17, 0
      %p70 = por %p68, %p69
      %s71 = ssub.s32 %s11, %s18
      %p72 = scmp.eq.s32.totalorder %s71, 0
      %s74 = sadd.s32 %s73, 1
      %s75 = scalar_select %p72, %s73, %s74
      %p78 = pneg %p72
      %p79 = scmp.eq.s32.totalorder %s11, 1
      %p80 = por %p78, %p79
      %p81 = scmp.ne.s32.totalorder %s73, %s76
      %p82 = scmp.eq.s32.totalorder %s11, 0
      %p83 = por %p81, %p82
      %p84 = scmp.ne.s32.totalorder %s73, %s76
      %p85 = scmp.eq.s32.totalorder %s16, 1
      %p86 = por %p84, %p85
      %p87 = scmp.ne.s32.totalorder %s76, %s77
      %p88 = scmp.eq.s32.totalorder %s16, 0
      %p89 = por %p87, %p88
      %p90 = scmp.ne.s32.totalorder %s76, %s77
      %p91 = scmp.eq.s32.totalorder %s17, 1
      %p92 = por %p90, %p91
      %p94 = scmp.ne.s32.totalorder %s77, %s93
      %p95 = scmp.eq.s32.totalorder %s17, 0
      %p96 = por %p94, %p95
      %p97 = scmp.le.s32.totalorder 1, %s11
      %p98 = scmp.lt.s32.totalorder %s11, 3
      %p99 = pnand %p97, %p98
      %p100 = pneg %p99
      // Predicated region
      $region9: #{tpu_custom_call.1} parent=5 // pred_check
        _
      $region10: #{tpu_custom_call.1} parent=5 // pred_check_branch
        %102 = sbr.rel (%p99) target = $region12
      $region11: #{tpu_custom_call.1} parent=5 // pred_region
        %s103 = ssub.s32 %s11, 1
      $region12: #{tpu_custom_call.1} parent=5 // pred_fallthru
        _
      %p104 = scmp.lt.s32.totalorder %s11, 2
      // Predicated region
      $region13: #{tpu_custom_call.1} parent=5 // pred_check
        %p105 = pneg %p104
      $region14: #{tpu_custom_call.1} parent=5 // pred_check_branch
        %107 = sbr.rel (%p105) target = $region16
      $region15: #{tpu_custom_call.1} parent=5 // pred_region
        // Predicated region
        $region17: #{tpu_custom_call.1} parent=15 // pred_check
          %p108 = pneg %p31
        $region18: #{tpu_custom_call.1} parent=15 // pred_check_branch
          %110 = sbr.rel (%p108) target = $region20
        $region19: #{tpu_custom_call.1} parent=15 // pred_region
          %s111 = smul.u32 5, %s11
          %s112 = ssub.s32 9, %s111
          %p113 = scmp.lt.s32.totalorder %s112, 5
          %s114 = scalar_select %p113, %s112, 5
          %s115 = smul.u32 8, %s114
          %p116 = scmp.lt.s32.totalorder %s111, 8
          %s117 = scalar_select %p116, %s111, 8
          %s118 = smul.addr %s117, 8
          %s119 = scalar_lea.vmem %s0, %s118
          %s120 = smul.u32 5, %s11
          %s121 = ssub.s32 9, %s120
          %p122 = scmp.lt.s32.totalorder %s121, 5
          %s123 = scalar_select %p122, %s121, 5
          %s124 = smul.u32 8, %s123
        $region20: #{tpu_custom_call.1} parent=15 // pred_fallthru
          _
        // Predicated region
        $region21: #{tpu_custom_call.1} parent=15 // pred_check
          %p125 = pneg %p57
        $region22: #{tpu_custom_call.1} parent=15 // pred_check_branch
          %127 = sbr.rel (%p125) target = $region24
        $region23: #{tpu_custom_call.1} parent=15 // pred_region
          %s128 = smul.u32 5, %s11
          %s129 = ssub.s32 9, %s128
          %p130 = scmp.lt.s32.totalorder %s129, 5
          %s131 = scalar_select %p130, %s129, 5
          %s132 = smul.u32 8, %s131
          %p133 = scmp.lt.s32.totalorder %s128, 8
          %s134 = scalar_select %p133, %s128, 8
          %s135 = smul.addr %s134, 8
          %s136 = scalar_lea.vmem %s1, %s135
          %s137 = smul.u32 5, %s11
          %s138 = ssub.s32 9, %s137
          %p139 = scmp.lt.s32.totalorder %s138, 5
          %s140 = scalar_select %p139, %s138, 5
          %s141 = smul.u32 8, %s140
        $region24: #{tpu_custom_call.1} parent=15 // pred_fallthru
          _
      $region16: #{tpu_custom_call.1} parent=5 // pred_fallthru
        _
      %p142 = scmp.le.s32.totalorder 1, %s11
      %p143 = scmp.lt.s32.totalorder %s11, 3
      %p144 = pnand %p142, %p143
      %p145 = pneg %p144
      // Predicated region
      $region25: #{tpu_custom_call.1} parent=5 // pred_check
        _
      $region26: #{tpu_custom_call.1} parent=5 // pred_check_branch
        %147 = sbr.rel (%p144) target = $region28
      $region27: #{tpu_custom_call.1} parent=5 // pred_region
        %s148 = ssub.s32 %s11, 1
        %s149 = smul.u32 5, %s16
        %s150 = ssub.s32 9, %s149
        %p151 = scmp.lt.s32.totalorder %s150, 5
        %s152 = scalar_select %p151, %s150, 5
        %s153 = smul.u32 8, %s152
        %p154 = scmp.lt.s32.totalorder %s149, 8
        %s155 = scalar_select %p154, %s149, 8
        %s156 = smul.addr %s155, 8
        %s157 = scalar_lea.vmem %s0, %s156
        %p158 = pneg %p37
        %p159 = pneg %p34
        %s160 = smul.u32 5, %s16
        %s161 = ssub.s32 9, %s160
        %p162 = scmp.lt.s32.totalorder %s161, 5
        %s163 = scalar_select %p162, %s161, 5
        %s164 = smul.u32 8, %s163
        %p165 = scmp.lt.s32.totalorder %s160, 8
        %s166 = scalar_select %p165, %s160, 8
        %s167 = smul.addr %s166, 8
        %s168 = scalar_lea.vmem %s1, %s167
        %p169 = pneg %p63
        %p170 = pneg %p60
        %p171 = pneg %p89
        %p172 = pneg %p86
        %s173 = sand.u32 %s76, 1
        %s174 = scalar_lea.sflag [#allocation3], %s173
        %s175 = sand.u32 %s76, 1
        %s176 = scalar_lea.vmem [#allocation2], %s175
        %s177 = smul.u32 5, %s16
        %s178 = ssub.s32 9, %s177
        %p179 = scmp.lt.s32.totalorder %s178, 5
        %s180 = scalar_select %p179, %s178, 5
        %s181 = smul.u32 8, %s180
        %p182 = scmp.lt.s32.totalorder %s177, 8
        %s183 = scalar_select %p182, %s177, 8
        %s184 = smul.addr %s183, 8
        %s185 = scalar_lea.vmem %s0, %s184
        %s186 = smul.u32 5, %s16
        %s187 = ssub.s32 9, %s186
        %p188 = scmp.lt.s32.totalorder %s187, 5
        %s189 = scalar_select %p188, %s187, 5
        %s190 = smul.u32 8, %s189
        %s191 = smul.u32 5, %s16
        %s192 = ssub.s32 9, %s191
        %p193 = scmp.lt.s32.totalorder %s192, 5
        %s194 = scalar_select %p193, %s192, 5
        %s195 = smul.u32 8, %s194
        %p196 = scmp.lt.s32.totalorder %s191, 8
        %s197 = scalar_select %p196, %s191, 8
        %s198 = smul.addr %s197, 8
        %s199 = scalar_lea.vmem %s1, %s198
        %s200 = smul.u32 5, %s16
        %s201 = ssub.s32 9, %s200
        %p202 = scmp.lt.s32.totalorder %s201, 5
        %s203 = scalar_select %p202, %s201, 5
        %s204 = smul.u32 8, %s203
        %v205 = vld [vmem:[%s185] sm:$0xff]
        %v206 = vld [vmem:[%s185 + $0x8] sm:$0xff]
        %v207 = vld [vmem:[%s185 + $0x10] sm:$0xff]
        %v208 = vld [vmem:[%s185 + $0x18] sm:$0xff]
        %v209 = vld [vmem:[%s185 + $0x20] sm:$0xff]
        %v210 = vld [vmem:[%s199] sm:$0xff]
        %v211 = vld [vmem:[%s199 + $0x8] sm:$0xff]
        %v212 = vld [vmem:[%s199 + $0x10] sm:$0xff]
        %v213 = vld [vmem:[%s199 + $0x18] sm:$0xff]
        %v214 = vld [vmem:[%s199 + $0x20] sm:$0xff]
        %vm215 = vcmask 261120
        %v216 = vsel %vm215, %v205, -inf
        %217 = vmax.xlane.f32.xlu0 %v216
        %v218 = vpop.xlane.xlu0 %217
        %v219 = vsel %vm215, %v206, -inf
        %220 = vmax.xlane.f32.xlu0 %v219
        %v221 = vpop.xlane.xlu0 %220
        %v222 = vsel %vm215, %v207, -inf
        %223 = vmax.xlane.f32.xlu0 %v222
        %v224 = vpop.xlane.xlu0 %223
        %v225 = vsel %vm215, %v208, -inf
        %226 = vmax.xlane.f32.xlu0 %v225
        %v227 = vpop.xlane.xlu0 %226
        %v228 = vsel %vm215, %v209, -inf
        %229 = vmax.xlane.f32.xlu0 %v228
        %v230 = vpop.xlane.xlu0 %229
        %v231 = vsub.f32 %v205, %v218
        %v232 = vsub.f32 %v206, %v221
        %v233 = vsub.f32 %v207, %v224
        %v234 = vsub.f32 %v208, %v227
        %v235 = vsub.f32 %v209, %v230
        %v236 = vmul.f32 %v231, 1.442695
        %v237 = vpow.pop %v236
        %v238 = vmul.f32 %v232, 1.442695
        %v239 = vpow.pop %v238
        %v240 = vmul.f32 %v233, 1.442695
        %v241 = vpow.pop %v240
        %v242 = vmul.f32 %v234, 1.442695
        %v243 = vpow.pop %v242
        %v244 = vmul.f32 %v235, 1.442695
        %v245 = vpow.pop %v244
        %v246 = vsel %vm215, %v237, 0.0
        %247 = vadd.xlane.f32.xlu0 %v246
        %v248 = vpop.xlane.xlu0 %247
        %v249 = vsel %vm215, %v239, 0.0
        %250 = vadd.xlane.f32.xlu0 %v249
        %v251 = vpop.xlane.xlu0 %250
        %v252 = vsel %vm215, %v241, 0.0
        %253 = vadd.xlane.f32.xlu0 %v252
        %v254 = vpop.xlane.xlu0 %253
        %v255 = vsel %vm215, %v243, 0.0
        %256 = vadd.xlane.f32.xlu0 %v255
        %v257 = vpop.xlane.xlu0 %256
        %v258 = vsel %vm215, %v245, 0.0
        %259 = vadd.xlane.f32.xlu0 %v258
        %v260 = vpop.xlane.xlu0 %259
        %v261 = vlog2.pop %v248
        %v262 = vmul.f32 %v261, 0.6931472
        %v263 = vlog2.pop %v251
        %v264 = vmul.f32 %v263, 0.6931472
        %v265 = vlog2.pop %v254
        %v266 = vmul.f32 %v265, 0.6931472
        %v267 = vlog2.pop %v257
        %v268 = vmul.f32 %v267, 0.6931472
        %v269 = vlog2.pop %v260
        %v270 = vmul.f32 %v269, 0.6931472
        %v271 = vadd.f32 %v262, %v218
        %v272 = vadd.f32 %v264, %v221
        %v273 = vadd.f32 %v266, %v224
        %v274 = vadd.f32 %v268, %v227
        %v275 = vadd.f32 %v270, %v230
        %v276 = vlaneseq
        %v277 = vand.u32 %v276, 127
        %278 = vset.pattern.permute.xlu0 0
        %279 = vperm.xlu0 %278, %v210
        %v280 = vpop.permute.xlu0 %279
        %281 = vset.pattern.permute.xlu0 0
        %282 = vperm.xlu0 %281, %v211
        %v283 = vpop.permute.xlu0 %282
        %284 = vset.pattern.permute.xlu0 0
        %285 = vperm.xlu0 %284, %v212
        %v286 = vpop.permute.xlu0 %285
        %287 = vset.pattern.permute.xlu0 0
        %288 = vperm.xlu0 %287, %v213
        %v289 = vpop.permute.xlu0 %288
        %290 = vset.pattern.permute.xlu0 0
        %291 = vperm.xlu0 %290, %v214
        %v292 = vpop.permute.xlu0 %291
        %vm293 = vcmp.eq.s32.totalorder %v277, %v280
        %vm294 = vcmp.eq.s32.totalorder %v277, %v283
        %vm295 = vcmp.eq.s32.totalorder %v277, %v286
        %vm296 = vcmp.eq.s32.totalorder %v277, %v289
        %vm297 = vcmp.eq.s32.totalorder %v277, %v292
        %v298 = vsel %vm293, %v205, 0.0
        %v299 = vsel %vm294, %v206, 0.0
        %v300 = vsel %vm295, %v207, 0.0
        %v301 = vsel %vm296, %v208, 0.0
        %v302 = vsel %vm297, %v209, 0.0
        %v303 = vsel %vm215, %v298, 0.0
        %304 = vadd.xlane.f32.xlu0 %v303
        %v305 = vpop.xlane.xlu0 %304
        %v306 = vsel %vm215, %v299, 0.0
        %307 = vadd.xlane.f32.xlu0 %v306
        %v308 = vpop.xlane.xlu0 %307
        %v309 = vsel %vm215, %v300, 0.0
        %310 = vadd.xlane.f32.xlu0 %v309
        %v311 = vpop.xlane.xlu0 %310
        %v312 = vsel %vm215, %v301, 0.0
        %313 = vadd.xlane.f32.xlu0 %v312
        %v314 = vpop.xlane.xlu0 %313
        %v315 = vsel %vm215, %v302, 0.0
        %316 = vadd.xlane.f32.xlu0 %v315
        %v317 = vpop.xlane.xlu0 %316
        %v318 = vsub.f32 %v271, %v305
        %v319 = vsub.f32 %v272, %v308
        %v320 = vsub.f32 %v273, %v311
        %v321 = vsub.f32 %v274, %v314
        %v322 = vsub.f32 %v275, %v317
        %v323 = vsub.f32 0.0, %v318
        %v324 = vsub.f32 0.0, %v319
        %v325 = vsub.f32 0.0, %v320
        %v326 = vsub.f32 0.0, %v321
        %v327 = vsub.f32 0.0, %v322
        %v328 = vmul.f32 %v323, 1.442695
        %v329 = vpow.pop %v328
        %v330 = vmul.f32 %v324, 1.442695
        %v331 = vpow.pop %v330
        %v332 = vmul.f32 %v325, 1.442695
        %v333 = vpow.pop %v332
        %v334 = vmul.f32 %v326, 1.442695
        %v335 = vpow.pop %v334
        %v336 = vmul.f32 %v327, 1.442695
        %v337 = vpow.pop %v336
        %v338 = vsub.f32 1.0, %v329
        %v339 = vsub.f32 1.0, %v331
        %v340 = vsub.f32 1.0, %v333
        %v341 = vsub.f32 1.0, %v335
        %v342 = vsub.f32 1.0, %v337
        %v343 = vmul.f32 %v338, %v338
        %v344 = vmul.f32 %v339, %v339
        %v345 = vmul.f32 %v340, %v340
        %v346 = vmul.f32 %v341, %v341
        %v347 = vmul.f32 %v342, %v342
        %v348 = vmul.f32 %v343, %v318
        %v349 = vmul.f32 %v344, %v319
        %v350 = vmul.f32 %v345, %v320
        %v351 = vmul.f32 %v346, %v321
        %v352 = vmul.f32 %v347, %v322
        %s353 = smul.u32 %s16, 40
        %v354 = vlaneseq
        %v355 = vshrl.u32 %v354, 7
        %v356 = vadd.s32 %v355, 8
        %v357 = vadd.s32 %v355, 16
        %v358 = vadd.s32 %v355, 24
        %v359 = vadd.s32 %v355, 32
        %v360 = vstv %s353
        %v361 = vadd.s32 %v360, %v355
        %v362 = vadd.s32 %v360, %v356
        %v363 = vadd.s32 %v360, %v357
        %v364 = vadd.s32 %v360, %v358
        %v365 = vadd.s32 %v360, %v359
        %vm366 = vcmp.lt.s32.totalorder %v361, 70
        %vm367 = vcmp.lt.s32.totalorder %v362, 70
        %vm368 = vcmp.lt.s32.totalorder %v363, 70
        %vm369 = vcmp.lt.s32.totalorder %v364, 70
        %vm370 = vcmp.lt.s32.totalorder %v365, 70
        %v371 = vsel %vm366, %v348, 0.0
        %v372 = vsel %vm367, %v349, 0.0
        %v373 = vsel %vm368, %v350, 0.0
        %v374 = vsel %vm369, %v351, 0.0
        %v375 = vsel %vm370, %v352, 0.0
        %vm376 = vcmask 7168
        %v377 = vsel %vm376, %v371, 0.0
        %v378 = vsel %vm376, %v372, 0.0
        %v379 = vadd.f32 %v377, %v378
        %v380 = vsel %vm376, %v373, 0.0
        %v381 = vadd.f32 %v379, %v380
        %v382 = vsel %vm376, %v374, 0.0
        %v383 = vadd.f32 %v381, %v382
        %v384 = vsel %vm376, %v375, 0.0
        %v385 = vadd.f32 %v383, %v384
        %386 = vadd.xlane.f32.xlu0 %v385
        %v387 = vpop.xlane.xlu0 %386
        %v388 = vrot.slane %v387, 4
        %v389 = vadd.f32 %v387, %v388
        %v390 = vrot.slane %v389, 2
        %v391 = vadd.f32 %v389, %v390
        %v392 = vrot.slane %v391, 1
        %v393 = vadd.f32 %v391, %v392
        %s394 = vtos %v393
        %v395 = vstv %s394
        %396 = vst [vmem:[%s176] sm:$0x1] %v395
        %s397 = sand.u32 %s76, 1
        %s398 = scalar_lea.sflag [#allocation3], %s397
        %s399 = sand.u32 %s76, 1
        %s400 = scalar_lea.vmem [#allocation2], %s399
        // Predicated region
        $region29: #{tpu_custom_call.1} parent=27 // pred_check
          %p401 = pneg %p86
        $region30: #{tpu_custom_call.1} parent=27 // pred_check_branch
          %403 = sbr.rel (%p401) target = $region32
        $region31: #{tpu_custom_call.1} parent=27 // pred_region
          %405 = vsyncadd %s398, 0
          %s406 = scalar_lea.hbm %s2, %s16
          %s408 = sshll.u32 %s400, 4
          %s409 = int_to_ptr.vmem [resolvable:$true] %s408
          %s410 = sshll.u32 %s406, 4
          %s411 = int_to_ptr.hbm [resolvable:$true] %s410
          %413 = dma.vmem_to_hbm [thread:$0]  %s409, 16, %s411, %s398
        $region32: #{tpu_custom_call.1} parent=27 // pred_fallthru
          _
      $region28: #{tpu_custom_call.1} parent=5 // pred_fallthru
        _
      %p414 = scmp.le.s32.totalorder 2, %s11
      // Predicated region
      $region33: #{tpu_custom_call.1} parent=5 // pred_check
        %p415 = pneg %p414
      $region34: #{tpu_custom_call.1} parent=5 // pred_check_branch
        %417 = sbr.rel (%p415) target = $region36
      $region35: #{tpu_custom_call.1} parent=5 // pred_region
        %s418 = ssub.s32 %s11, 2
        // Predicated region
        $region37: #{tpu_custom_call.1} parent=35 // pred_check
          %p419 = pneg %p92
        $region38: #{tpu_custom_call.1} parent=35 // pred_check_branch
          %421 = sbr.rel (%p419) target = $region40
        $region39: #{tpu_custom_call.1} parent=35 // pred_region
          %s422 = sand.u32 %s77, 1
          %s423 = scalar_lea.sflag [#allocation3], %s422
          %s424 = sand.u32 %s77, 1
          %s425 = scalar_lea.vmem [#allocation2], %s424
          %427 = dma.done %s423, 16
        $region40: #{tpu_custom_call.1} parent=35 // pred_fallthru
          _
      $region36: #{tpu_custom_call.1} parent=5 // pred_fallthru
        _
    $region6: #{tpu_custom_call.1} parent=1 // loop_footer
      %s15 = sadd.s32 1, %s11
    $region7: #{tpu_custom_call.1} parent=1 // loop_footer_branch
      %10 = sbr.rel target = $region3
    $region8: #{tpu_custom_call.1} parent=1 // loop_exit
      _
    %428 = vsyncpa [#allocation3], 1
    %s429 = scalar_lea.sflag [#allocation3], 1
    %430 = vsyncpa %s429, 1

</llo_original>
